<compile_context>
chip_gen: v6e
topology: v6e:2x2x1
jax: 0.10.0
libtpu: 0.0.40
codegen_flags: <defaults>
</compile_context>

<pallas_src>
import jax
import jax.numpy as jnp
from jax.experimental import pallas as pl
from jax.experimental.pallas import tpu as pltpu


def _round_up(x, m):
    return ((x + m - 1) // m) * m


def _logsigmoid(x):
    # numerically stable logsigmoid, same as torch.nn.functional.logsigmoid
    return jnp.minimum(x, 0.0) - jnp.log1p(jnp.exp(-jnp.abs(x)))


def cbow_hs_loss_pallas(pos_u_sum, pos_w_emb, neg_u_sum, neg_w_emb, *,
                        block_b=None, vmem_budget_bytes=48 * 1024 * 1024):
    """pos_u_sum/neg_u_sum: (B, D) context-summed embeddings;
    pos_w_emb/neg_w_emb: (B, D) HS node embeddings. Returns scalar f32 loss."""
    B, D = pos_u_sum.shape
    assert pos_w_emb.shape == (B, D)
    assert neg_u_sum.shape == (B, D)
    assert neg_w_emb.shape == (B, D)

    # Bytes per batch row across the four streamed inputs, double-buffered.
    itembytes = sum(jnp.dtype(a.dtype).itemsize
                    for a in (pos_u_sum, pos_w_emb, neg_u_sum, neg_w_emb))
    bytes_per_row = 2 * D * itembytes

    if block_b is None:
        # Size the batch tile from the VMEM budget (leave ~half for headroom:
        # output tiles, temps, compiler scratch), cap so both v7x TCs get work.
        tb = (vmem_budget_bytes // 2) // max(bytes_per_row, 1)
        tb = min(tb, 8192)
        tb = min(tb, _round_up(pl.cdiv(B, 2), 8))
    else:
        tb = block_b
    tb = _round_up(max(8, min(tb, _round_up(B, 8))), 8)

    g = pl.cdiv(B, tb)   # ragged last tile handled by the in-kernel mask

    def kernel(pu_ref, pw_ref, nu_ref, nw_ref, part_ref):
        # All refs are (tb, D) in the stored dtype; math is done in f32
        # (required on v5e which has no bf16 VPU/EUP; a no-op for f32 tables).
        pu = pu_ref[...].astype(jnp.float32)
        pw = pw_ref[...].astype(jnp.float32)
        nu = nu_ref[...].astype(jnp.float32)
        nw = nw_ref[...].astype(jnp.float32)

        s1 = jnp.sum(pu * pw, axis=-1, keepdims=True)   # (tb, 1)
        s2 = jnp.sum(nu * nw, axis=-1, keepdims=True)   # (tb, 1)

        l = _logsigmoid(s1) + _logsigmoid(-s2)           # (tb, 1)

        # Mask rows past B (the ragged last tile reads unspecified data;
        # jnp.where is an elementwise select, so NaN/garbage there is harmless).
        row0 = pl.program_id(0) * tb
        rows = row0 + jax.lax.broadcasted_iota(jnp.int32, (tb, 1), 0)
        contrib = jnp.where(rows < B, l, 0.0)

        partial = -jnp.sum(contrib, keepdims=True)       # (1, 1)
        # Each grid step owns an independent lane-dense (8,128) output tile so
        # the grid axis can be "parallel" (megacore) and the store is unmasked.
        part_ref[...] = jnp.broadcast_to(partial[None], (1, 8, 128))

    partials = pl.pallas_call(
        kernel,
        out_shape=jax.ShapeDtypeStruct((g, 8, 128), jnp.float32),
        grid=(g,),
        in_specs=[
            pl.BlockSpec((tb, D), lambda i: (i, 0)),
            pl.BlockSpec((tb, D), lambda i: (i, 0)),
            pl.BlockSpec((tb, D), lambda i: (i, 0)),
            pl.BlockSpec((tb, D), lambda i: (i, 0)),
        ],
        out_specs=pl.BlockSpec((1, 8, 128), lambda i: (i, 0, 0)),
        compiler_params=pltpu.CompilerParams(
            dimension_semantics=("parallel",),
            vmem_limit_bytes=vmem_budget_bytes,
        ),
    )(pos_u_sum, pos_w_emb, neg_u_sum, neg_w_emb)

    return jnp.sum(partials[:, 0, 0])


class CBowHSModelPallas:
    """Mirrors CBowHSModel.__init__ shapes: two (2*vocab_size - 1, embed_size) tables."""

    def __init__(self, vocab_size, embed_size, key):
        self.vocab_size = vocab_size
        self.embed_size = embed_size
        n_nodes = 2 * vocab_size - 1
        int_range = 0.5 / embed_size
        ku, kw = jax.random.split(key)
        self.u_embeddings = jax.random.uniform(
            ku, (n_nodes, embed_size), jnp.float32, -int_range, int_range)
        # NOTE: the original init sets w_embeddings to exactly zero
        # (uniform_(-0, 0)), which makes the forward pass degenerate
        # (loss == 2*B*ln 2).  We use a small deterministic random init here so
        # the kernel is exercised with non-trivial numerics.
        self.w_embeddings = jax.random.uniform(
            kw, (n_nodes, embed_size), jnp.float32, -int_range, int_range)

    def forward(self, pos_u, pos_w, neg_u, neg_w, *, block_b=None):
        # pos_u / neg_u: (B, C) int32 context-word ids (fixed context size C)
        # pos_w / neg_w: (B,)   int32 HS node ids
        # Context pre-reduction: XLA fuses the gather with the sum, so only the
        # (B, D) context sums ever hit HBM downstream of the table (no (B, C, D)
        # round trip).  Embeddings stay in their stored dtype end-to-end.
        pos_u_sum = jnp.take(self.u_embeddings, pos_u, axis=0).sum(axis=1)   # (B, D)
        neg_u_sum = jnp.take(self.u_embeddings, neg_u, axis=0).sum(axis=1)   # (B, D)
        pos_w_emb = jnp.take(self.w_embeddings, pos_w, axis=0)               # (B, D)
        neg_w_emb = jnp.take(self.w_embeddings, neg_w, axis=0)               # (B, D)
        return cbow_hs_loss_pallas(pos_u_sum, pos_w_emb, neg_u_sum, neg_w_emb,
                                   block_b=block_b)

    def forward_ref(self, pos_u, pos_w, neg_u, neg_w):
        # pure-JAX reference for correctness checking
        pos_u_e = jnp.take(self.u_embeddings, pos_u, axis=0).sum(axis=1)
        neg_u_e = jnp.take(self.u_embeddings, neg_u, axis=0).sum(axis=1)
        pos_w_e = jnp.take(self.w_embeddings, pos_w, axis=0)
        neg_w_e = jnp.take(self.w_embeddings, neg_w, axis=0)
        s1 = jnp.sum(pos_u_e * pos_w_e, axis=1)
        s2 = jnp.sum(neg_u_e * neg_w_e, axis=1)
        return -(jnp.sum(_logsigmoid(s1)) + jnp.sum(_logsigmoid(-s2)))


if __name__ == "__main__":
    vocab_size = 50
    embed_size = 32   # D
    B = 50            # number of (context, node) pairs (NOT a multiple of the tile
                      # -> exercises the ragged last tile + in-kernel mask)
    C = 4             # fixed context window size

    key = jax.random.PRNGKey(0)
    k_model, k1, k2, k3, k4 = jax.random.split(key, 5)

    model = CBowHSModelPallas(vocab_size, embed_size, k_model)

    n_nodes = 2 * vocab_size - 1
    pos_u = jax.random.randint(k1, (B, C), 0, vocab_size, dtype=jnp.int32)
    neg_u = jax.random.randint(k2, (B, C), 0, vocab_size, dtype=jnp.int32)
    pos_w = jax.random.randint(k3, (B,), 0, n_nodes, dtype=jnp.int32)
    neg_w = jax.random.randint(k4, (B,), 0, n_nodes, dtype=jnp.int32)

    loss_ref = model.forward_ref(pos_u, pos_w, neg_u, neg_w)
    jax.block_until_ready(loss_ref)

    # 1) explicit small tile -> 4 grid steps, ragged last tile (50 = 3*16 + 2):
    #    exercises tiling, masking and the parallel per-tile partial reduction.
    loss_small = model.forward(pos_u, pos_w, neg_u, neg_w, block_b=16)
    jax.block_until_ready(loss_small)
    assert jnp.allclose(loss_small, loss_ref, rtol=1e-5, atol=1e-5), (loss_small, loss_ref)

    # 2) default VMEM-budget-derived tile sizing (the fast path).
    loss_auto = model.forward(pos_u, pos_w, neg_u, neg_w)
    jax.block_until_ready(loss_auto)
    assert jnp.allclose(loss_auto, loss_ref, rtol=1e-5, atol=1e-5), (loss_auto, loss_ref)

    print("KERNEL_OK")
</pallas_src>

<mosaic_0001>
module attributes {stable_mosaic.version = 11 : i64} {
  func.func @kernel(%arg0: i32, %arg1: memref<16x32xf32, #tpu.memory_space<vmem>>, %arg2: memref<16x32xf32, #tpu.memory_space<vmem>>, %arg3: memref<16x32xf32, #tpu.memory_space<vmem>>, %arg4: memref<16x32xf32, #tpu.memory_space<vmem>>, %arg5: memref<1x8x128xf32, #tpu.memory_space<vmem>>) attributes {dimension_semantics = [#tpu.dimension_semantics<parallel>], iteration_bounds = array<i64: 4>, scalar_prefetch = 0 : i64, scratch_operands = 0 : i64, tpu.core_type = #tpu.core_type<tc>, window_params = [{transform_indices = @transform_0, window_bounds = array<i64: 16, 32>}, {transform_indices = @transform_1, window_bounds = array<i64: 16, 32>}, {transform_indices = @transform_2, window_bounds = array<i64: 16, 32>}, {transform_indices = @transform_3, window_bounds = array<i64: 16, 32>}, {transform_indices = @transform_4, window_bounds = array<i64: 1, 8, 128>}]} {
    %c0 = arith.constant 0 : index
    %c0_0 = arith.constant 0 : index
    %0 = vector.load %arg1[%c0, %c0_0] : memref<16x32xf32, #tpu.memory_space<vmem>>, vector<16x32xf32>
    %c0_1 = arith.constant 0 : index
    %c0_2 = arith.constant 0 : index
    %1 = vector.load %arg2[%c0_1, %c0_2] : memref<16x32xf32, #tpu.memory_space<vmem>>, vector<16x32xf32>
    %c0_3 = arith.constant 0 : index
    %c0_4 = arith.constant 0 : index
    %2 = vector.load %arg3[%c0_3, %c0_4] : memref<16x32xf32, #tpu.memory_space<vmem>>, vector<16x32xf32>
    %c0_5 = arith.constant 0 : index
    %c0_6 = arith.constant 0 : index
    %3 = vector.load %arg4[%c0_5, %c0_6] : memref<16x32xf32, #tpu.memory_space<vmem>>, vector<16x32xf32>
    %4 = arith.mulf %0, %1 : vector<16x32xf32>
    %cst = arith.constant dense<0.000000e+00> : vector<16xf32>
    %5 = vector.multi_reduction <add>, %4, %cst [1] : vector<16x32xf32> to vector<16xf32>
    %6 = vector.shape_cast %5 : vector<16xf32> to vector<16x1xf32>
    %7 = arith.mulf %2, %3 : vector<16x32xf32>
    %cst_7 = arith.constant dense<0.000000e+00> : vector<16xf32>
    %8 = vector.multi_reduction <add>, %7, %cst_7 [1] : vector<16x32xf32> to vector<16xf32>
    %9 = vector.shape_cast %8 : vector<16xf32> to vector<16x1xf32>
    %cst_8 = arith.constant 0.000000e+00 : f32
    %10 = vector.broadcast %cst_8 : f32 to vector<16x1xf32>
    %11 = arith.minimumf %6, %10 : vector<16x1xf32>
    %12 = math.absf %6 : vector<16x1xf32>
    %cst_9 = arith.constant 0.000000e+00 : f32
    %13 = vector.broadcast %cst_9 : f32 to vector<16x1xf32>
    %14 = arith.subf %13, %12 : vector<16x1xf32>
    %15 = math.exp %14 : vector<16x1xf32>
    %16 = math.log1p %15 : vector<16x1xf32>
    %17 = arith.subf %11, %16 : vector<16x1xf32>
    %cst_10 = arith.constant 0.000000e+00 : f32
    %18 = vector.broadcast %cst_10 : f32 to vector<16x1xf32>
    %19 = arith.subf %18, %9 : vector<16x1xf32>
    %cst_11 = arith.constant 0.000000e+00 : f32
    %20 = vector.broadcast %cst_11 : f32 to vector<16x1xf32>
    %21 = arith.minimumf %19, %20 : vector<16x1xf32>
    %22 = math.absf %19 : vector<16x1xf32>
    %cst_12 = arith.constant 0.000000e+00 : f32
    %23 = vector.broadcast %cst_12 : f32 to vector<16x1xf32>
    %24 = arith.subf %23, %22 : vector<16x1xf32>
    %25 = math.exp %24 : vector<16x1xf32>
    %26 = math.log1p %25 : vector<16x1xf32>
    %27 = arith.subf %21, %26 : vector<16x1xf32>
    %28 = arith.addf %17, %27 : vector<16x1xf32>
    %c16_i32 = arith.constant 16 : i32
    %29 = arith.muli %arg0, %c16_i32 : i32
    %30 = tpu.iota {dimensions = array<i32: 0>} : vector<16x1xi32>
    %31 = vector.broadcast %29 : i32 to vector<16x1xi32>
    %32 = arith.addi %31, %30 : vector<16x1xi32>
    %c50_i32 = arith.constant 50 : i32
    %33 = vector.broadcast %c50_i32 : i32 to vector<16x1xi32>
    %34 = arith.cmpi slt, %32, %33 : vector<16x1xi32>
    %cst_13 = arith.constant 0.000000e+00 : f32
    %35 = vector.broadcast %cst_13 : f32 to vector<16x1xf32>
    %36 = arith.select %34, %28, %35 : vector<16x1xi1>, vector<16x1xf32>
    %37 = vector.shape_cast %36 : vector<16x1xf32> to vector<1x16x1xf32>
    %cst_14 = arith.constant dense<0.000000e+00> : vector<1xf32>
    %38 = vector.multi_reduction <add>, %37, %cst_14 [1, 2] : vector<1x16x1xf32> to vector<1xf32>
    %39 = vector.shape_cast %38 : vector<1xf32> to vector<1x1x1xf32>
    %40 = vector.extract %39[0, 0, 0] : f32 from vector<1x1x1xf32>
    %41 = vector.broadcast %40 : f32 to vector<1x1xf32>
    %cst_15 = arith.constant 0.000000e+00 : f32
    %42 = vector.broadcast %cst_15 : f32 to vector<1x1xf32>
    %43 = arith.subf %42, %41 : vector<1x1xf32>
    %44 = vector.shape_cast %43 : vector<1x1xf32> to vector<1x1x1xf32>
    %45 = vector.shape_cast %44 : vector<1x1x1xf32> to vector<1x1x1xf32>
    %46 = vector.broadcast %45 : vector<1x1x1xf32> to vector<1x8x128xf32>
    %c0_16 = arith.constant 0 : index
    %c0_17 = arith.constant 0 : index
    %c0_18 = arith.constant 0 : index
    %47 = vector.load %arg5[%c0_16, %c0_17, %c0_18] : memref<1x8x128xf32, #tpu.memory_space<vmem>>, vector<1x8x128xf32>
    tpu.vector_store %arg5[%c0_16, %c0_17, %c0_18], %46 {strides = array<i32>} : memref<1x8x128xf32, #tpu.memory_space<vmem>>, vector<1x8x128xf32>,
    return
  }
  func.func @transform_0(%arg0: i32) -> (i32, i32) {
    %c0_i32 = arith.constant 0 : i32
    %c0_i32_0 = arith.constant 0 : i32
    return %arg0, %c0_i32 : i32, i32
  }
  func.func @transform_1(%arg0: i32) -> (i32, i32) {
    %c0_i32 = arith.constant 0 : i32
    %c0_i32_0 = arith.constant 0 : i32
    return %arg0, %c0_i32 : i32, i32
  }
  func.func @transform_2(%arg0: i32) -> (i32, i32) {
    %c0_i32 = arith.constant 0 : i32
    %c0_i32_0 = arith.constant 0 : i32
    return %arg0, %c0_i32 : i32, i32
  }
  func.func @transform_3(%arg0: i32) -> (i32, i32) {
    %c0_i32 = arith.constant 0 : i32
    %c0_i32_0 = arith.constant 0 : i32
    return %arg0, %c0_i32 : i32, i32
  }
  func.func @transform_4(%arg0: i32) -> (i32, i32, i32) {
    %c0_i32 = arith.constant 0 : i32
    %c0_i32_0 = arith.constant 0 : i32
    %c0_i32_1 = arith.constant 0 : i32
    return %arg0, %c0_i32, %c0_i32_0 : i32, i32, i32
  }
}

</mosaic_0001>

<llo_original>
// kernel: tpu_custom_call.1
$region0: #{tpu_custom_call.1}
  #allocation0 [shape = 'u32[]', space=smem, size = 0x4, offset = 0x4, fixed_abs, tag = 'smem constant byte address 0x4 - core index']
  #allocation1 [shape = 'u32[144,128]{1,0:T(1,128)}', space=vmem, size = 0x12000, scoped, tag = 'internal scratch']
  %s0 = inlined_call_operand.vmem [shape: f32[50,32], index: 0, kind: input, shape index: {}]
  %s1 = inlined_call_operand.vmem [shape: f32[50,32], index: 1, kind: input, shape index: {}]
  %s2 = inlined_call_operand.vmem [shape: f32[50,32], index: 2, kind: input, shape index: {}]
  %s3 = inlined_call_operand.vmem [shape: f32[50,32], index: 3, kind: input, shape index: {}]
  %s4 = inlined_call_operand.hbm [shape: f32[4,8,128], index: 4, kind: output, shape index: {}]
  %s5 = sld [smem:[#allocation0]]
  $region49: #{tpu_custom_call.1} parent=0
    _
  %s7 = ssub.s32 1, %s5
  %s8 = scalar_select 0, %s7, %s5
  $region1: #{tpu_custom_call.1} parent=0
    #allocation2 [shape = 'u8[8192]{0}', space=vmem, size = 0x2000, scoped, tag = 'output window, operand 0']
    #allocation3 [shape = 's32[2]{0}', space=sflag, size = 0x8, scoped, tag = 'scoped memory for tpu_custom_call.1']
    %9 = vsyncpa [#allocation3], 0
    %s10 = scalar_lea.sflag [#allocation3], 1
    %11 = vsyncpa %s10, 0
    loop: start=0, step=1, limit=6
    $region2: #{tpu_custom_call.1} parent=1 // loop_pre_header
      _
    $region3: #{tpu_custom_call.1} parent=1 // loop_header
      %s13 = sphi 0, %s17
      %p14 = scmp.ge.s32.totalorder %s13, 6
      %s23 = sphi 0, %s25
      %s26 = sphi 0, %s23
      %s27 = sphi 0, %s26
      %s43 = sphi 0, %s27
      %s49 = sphi 0, %s51
      %s52 = sphi 0, %s49
      %s53 = sphi 0, %s52
      %s69 = sphi 0, %s53
      %s75 = sphi 0, %s77
      %s78 = sphi 0, %s75
      %s79 = sphi 0, %s78
      %s95 = sphi 0, %s79
      %s101 = sphi 0, %s103
      %s104 = sphi 0, %s101
      %s105 = sphi 0, %s104
      %s121 = sphi 0, %s105
      %s127 = sphi 0, %s129
      %s130 = sphi 0, %s127
      %s131 = sphi 0, %s130
      %s147 = sphi 0, %s131
    $region4: #{tpu_custom_call.1} parent=1 // loop_header_branch
      %16 = sbr.rel (%p14) target = $region8
    $region5: #{tpu_custom_call.1} parent=1 // loop_body
      %s18 = ssub.s32 %s13, 1
      %s19 = ssub.s32 %s13, 2
      %s20 = sadd.s32 %s13, 1
      %s21 = ssub.s32 %s13, %s20
      %p22 = scmp.eq.s32.totalorder %s21, 0
      %s24 = sadd.s32 %s23, 1
      %s25 = scalar_select %p22, %s23, %s24
      %p28 = pneg %p22
      %p29 = scmp.eq.s32.totalorder %s13, 3
      %p30 = por %p28, %p29
      %p31 = scmp.ne.s32.totalorder %s23, %s26
      %p32 = scmp.eq.s32.totalorder %s13, 0
      %p33 = por %p31, %p32
      %p34 = scmp.ne.s32.totalorder %s23, %s26
      %p35 = scmp.eq.s32.totalorder %s18, 3
      %p36 = por %p34, %p35
      %p37 = scmp.ne.s32.totalorder %s26, %s27
      %p38 = scmp.eq.s32.totalorder %s18, 0
      %p39 = por %p37, %p38
      %p40 = scmp.ne.s32.totalorder %s26, %s27
      %p41 = scmp.eq.s32.totalorder %s19, 3
      %p42 = por %p40, %p41
      %p44 = scmp.ne.s32.totalorder %s27, %s43
      %p45 = scmp.eq.s32.totalorder %s19, 0
      %p46 = por %p44, %p45
      %s47 = ssub.s32 %s13, %s20
      %p48 = scmp.eq.s32.totalorder %s47, 0
      %s50 = sadd.s32 %s49, 1
      %s51 = scalar_select %p48, %s49, %s50
      %p54 = pneg %p48
      %p55 = scmp.eq.s32.totalorder %s13, 3
      %p56 = por %p54, %p55
      %p57 = scmp.ne.s32.totalorder %s49, %s52
      %p58 = scmp.eq.s32.totalorder %s13, 0
      %p59 = por %p57, %p58
      %p60 = scmp.ne.s32.totalorder %s49, %s52
      %p61 = scmp.eq.s32.totalorder %s18, 3
      %p62 = por %p60, %p61
      %p63 = scmp.ne.s32.totalorder %s52, %s53
      %p64 = scmp.eq.s32.totalorder %s18, 0
      %p65 = por %p63, %p64
      %p66 = scmp.ne.s32.totalorder %s52, %s53
      %p67 = scmp.eq.s32.totalorder %s19, 3
      %p68 = por %p66, %p67
      %p70 = scmp.ne.s32.totalorder %s53, %s69
      %p71 = scmp.eq.s32.totalorder %s19, 0
      %p72 = por %p70, %p71
      %s73 = ssub.s32 %s13, %s20
      %p74 = scmp.eq.s32.totalorder %s73, 0
      %s76 = sadd.s32 %s75, 1
      %s77 = scalar_select %p74, %s75, %s76
      %p80 = pneg %p74
      %p81 = scmp.eq.s32.totalorder %s13, 3
      %p82 = por %p80, %p81
      %p83 = scmp.ne.s32.totalorder %s75, %s78
      %p84 = scmp.eq.s32.totalorder %s13, 0
      %p85 = por %p83, %p84
      %p86 = scmp.ne.s32.totalorder %s75, %s78
      %p87 = scmp.eq.s32.totalorder %s18, 3
      %p88 = por %p86, %p87
      %p89 = scmp.ne.s32.totalorder %s78, %s79
      %p90 = scmp.eq.s32.totalorder %s18, 0
      %p91 = por %p89, %p90
      %p92 = scmp.ne.s32.totalorder %s78, %s79
      %p93 = scmp.eq.s32.totalorder %s19, 3
      %p94 = por %p92, %p93
      %p96 = scmp.ne.s32.totalorder %s79, %s95
      %p97 = scmp.eq.s32.totalorder %s19, 0
      %p98 = por %p96, %p97
      %s99 = ssub.s32 %s13, %s20
      %p100 = scmp.eq.s32.totalorder %s99, 0
      %s102 = sadd.s32 %s101, 1
      %s103 = scalar_select %p100, %s101, %s102
      %p106 = pneg %p100
      %p107 = scmp.eq.s32.totalorder %s13, 3
      %p108 = por %p106, %p107
      %p109 = scmp.ne.s32.totalorder %s101, %s104
      %p110 = scmp.eq.s32.totalorder %s13, 0
      %p111 = por %p109, %p110
      %p112 = scmp.ne.s32.totalorder %s101, %s104
      %p113 = scmp.eq.s32.totalorder %s18, 3
      %p114 = por %p112, %p113
      %p115 = scmp.ne.s32.totalorder %s104, %s105
      %p116 = scmp.eq.s32.totalorder %s18, 0
      %p117 = por %p115, %p116
      %p118 = scmp.ne.s32.totalorder %s104, %s105
      %p119 = scmp.eq.s32.totalorder %s19, 3
      %p120 = por %p118, %p119
      %p122 = scmp.ne.s32.totalorder %s105, %s121
      %p123 = scmp.eq.s32.totalorder %s19, 0
      %p124 = por %p122, %p123
      %s125 = ssub.s32 %s13, %s20
      %p126 = scmp.eq.s32.totalorder %s125, 0
      %s128 = sadd.s32 %s127, 1
      %s129 = scalar_select %p126, %s127, %s128
      %p132 = pneg %p126
      %p133 = scmp.eq.s32.totalorder %s13, 3
      %p134 = por %p132, %p133
      %p135 = scmp.ne.s32.totalorder %s127, %s130
      %p136 = scmp.eq.s32.totalorder %s13, 0
      %p137 = por %p135, %p136
      %p138 = scmp.ne.s32.totalorder %s127, %s130
      %p139 = scmp.eq.s32.totalorder %s18, 3
      %p140 = por %p138, %p139
      %p141 = scmp.ne.s32.totalorder %s130, %s131
      %p142 = scmp.eq.s32.totalorder %s18, 0
      %p143 = por %p141, %p142
      %p144 = scmp.ne.s32.totalorder %s130, %s131
      %p145 = scmp.eq.s32.totalorder %s19, 3
      %p146 = por %p144, %p145
      %p148 = scmp.ne.s32.totalorder %s131, %s147
      %p149 = scmp.eq.s32.totalorder %s19, 0
      %p150 = por %p148, %p149
      %p151 = scmp.le.s32.totalorder 1, %s13
      %p152 = scmp.lt.s32.totalorder %s13, 5
      %p153 = pnand %p151, %p152
      %p154 = pneg %p153
      // Predicated region
      $region9: #{tpu_custom_call.1} parent=5 // pred_check
        _
      $region10: #{tpu_custom_call.1} parent=5 // pred_check_branch
        %156 = sbr.rel (%p153) target = $region12
      $region11: #{tpu_custom_call.1} parent=5 // pred_region
        %s157 = ssub.s32 %s13, 1
      $region12: #{tpu_custom_call.1} parent=5 // pred_fallthru
        _
      %p158 = scmp.lt.s32.totalorder %s13, 4
      // Predicated region
      $region13: #{tpu_custom_call.1} parent=5 // pred_check
        %p159 = pneg %p158
      $region14: #{tpu_custom_call.1} parent=5 // pred_check_branch
        %161 = sbr.rel (%p159) target = $region16
      $region15: #{tpu_custom_call.1} parent=5 // pred_region
        // Predicated region
        $region17: #{tpu_custom_call.1} parent=15 // pred_check
          %p162 = pneg %p33
        $region18: #{tpu_custom_call.1} parent=15 // pred_check_branch
          %164 = sbr.rel (%p162) target = $region20
        $region19: #{tpu_custom_call.1} parent=15 // pred_region
          %s165 = smul.u32 2, %s13
          %s166 = ssub.s32 7, %s165
          %p167 = scmp.lt.s32.totalorder %s166, 2
          %s168 = scalar_select %p167, %s166, 2
          %s169 = smul.u32 128, %s168
          %p170 = scmp.lt.s32.totalorder %s165, 6
          %s171 = scalar_select %p170, %s165, 6
          %s172 = smul.addr %s171, 8
          %s173 = scalar_lea.vmem %s0, %s172
          %s174 = smul.u32 2, %s13
          %s175 = ssub.s32 7, %s174
          %p176 = scmp.lt.s32.totalorder %s175, 2
          %s177 = scalar_select %p176, %s175, 2
          %s178 = smul.u32 128, %s177
        $region20: #{tpu_custom_call.1} parent=15 // pred_fallthru
          _
        // Predicated region
        $region21: #{tpu_custom_call.1} parent=15 // pred_check
          %p179 = pneg %p59
        $region22: #{tpu_custom_call.1} parent=15 // pred_check_branch
          %181 = sbr.rel (%p179) target = $region24
        $region23: #{tpu_custom_call.1} parent=15 // pred_region
          %s182 = smul.u32 2, %s13
          %s183 = ssub.s32 7, %s182
          %p184 = scmp.lt.s32.totalorder %s183, 2
          %s185 = scalar_select %p184, %s183, 2
          %s186 = smul.u32 128, %s185
          %p187 = scmp.lt.s32.totalorder %s182, 6
          %s188 = scalar_select %p187, %s182, 6
          %s189 = smul.addr %s188, 8
          %s190 = scalar_lea.vmem %s1, %s189
          %s191 = smul.u32 2, %s13
          %s192 = ssub.s32 7, %s191
          %p193 = scmp.lt.s32.totalorder %s192, 2
          %s194 = scalar_select %p193, %s192, 2
          %s195 = smul.u32 128, %s194
        $region24: #{tpu_custom_call.1} parent=15 // pred_fallthru
          _
        // Predicated region
        $region25: #{tpu_custom_call.1} parent=15 // pred_check
          %p196 = pneg %p85
        $region26: #{tpu_custom_call.1} parent=15 // pred_check_branch
          %198 = sbr.rel (%p196) target = $region28
        $region27: #{tpu_custom_call.1} parent=15 // pred_region
          %s199 = smul.u32 2, %s13
          %s200 = ssub.s32 7, %s199
          %p201 = scmp.lt.s32.totalorder %s200, 2
          %s202 = scalar_select %p201, %s200, 2
          %s203 = smul.u32 128, %s202
          %p204 = scmp.lt.s32.totalorder %s199, 6
          %s205 = scalar_select %p204, %s199, 6
          %s206 = smul.addr %s205, 8
          %s207 = scalar_lea.vmem %s2, %s206
          %s208 = smul.u32 2, %s13
          %s209 = ssub.s32 7, %s208
          %p210 = scmp.lt.s32.totalorder %s209, 2
          %s211 = scalar_select %p210, %s209, 2
          %s212 = smul.u32 128, %s211
        $region28: #{tpu_custom_call.1} parent=15 // pred_fallthru
          _
        // Predicated region
        $region29: #{tpu_custom_call.1} parent=15 // pred_check
          %p213 = pneg %p111
        $region30: #{tpu_custom_call.1} parent=15 // pred_check_branch
          %215 = sbr.rel (%p213) target = $region32
        $region31: #{tpu_custom_call.1} parent=15 // pred_region
          %s216 = smul.u32 2, %s13
          %s217 = ssub.s32 7, %s216
          %p218 = scmp.lt.s32.totalorder %s217, 2
          %s219 = scalar_select %p218, %s217, 2
          %s220 = smul.u32 128, %s219
          %p221 = scmp.lt.s32.totalorder %s216, 6
          %s222 = scalar_select %p221, %s216, 6
          %s223 = smul.addr %s222, 8
          %s224 = scalar_lea.vmem %s3, %s223
          %s225 = smul.u32 2, %s13
          %s226 = ssub.s32 7, %s225
          %p227 = scmp.lt.s32.totalorder %s226, 2
          %s228 = scalar_select %p227, %s226, 2
          %s229 = smul.u32 128, %s228
        $region32: #{tpu_custom_call.1} parent=15 // pred_fallthru
          _
      $region16: #{tpu_custom_call.1} parent=5 // pred_fallthru
        _
      %p230 = scmp.le.s32.totalorder 1, %s13
      %p231 = scmp.lt.s32.totalorder %s13, 5
      %p232 = pnand %p230, %p231
      %p233 = pneg %p232
      // Predicated region
      $region33: #{tpu_custom_call.1} parent=5 // pred_check
        _
      $region34: #{tpu_custom_call.1} parent=5 // pred_check_branch
        %235 = sbr.rel (%p232) target = $region36
      $region35: #{tpu_custom_call.1} parent=5 // pred_region
        %s236 = ssub.s32 %s13, 1
        %s237 = smul.u32 2, %s18
        %s238 = ssub.s32 7, %s237
        %p239 = scmp.lt.s32.totalorder %s238, 2
        %s240 = scalar_select %p239, %s238, 2
        %s241 = smul.u32 128, %s240
        %p242 = scmp.lt.s32.totalorder %s237, 6
        %s243 = scalar_select %p242, %s237, 6
        %s244 = smul.addr %s243, 8
        %s245 = scalar_lea.vmem %s0, %s244
        %p246 = pneg %p39
        %p247 = pneg %p36
        %s248 = smul.u32 2, %s18
        %s249 = ssub.s32 7, %s248
        %p250 = scmp.lt.s32.totalorder %s249, 2
        %s251 = scalar_select %p250, %s249, 2
        %s252 = smul.u32 128, %s251
        %p253 = scmp.lt.s32.totalorder %s248, 6
        %s254 = scalar_select %p253, %s248, 6
        %s255 = smul.addr %s254, 8
        %s256 = scalar_lea.vmem %s1, %s255
        %p257 = pneg %p65
        %p258 = pneg %p62
        %s259 = smul.u32 2, %s18
        %s260 = ssub.s32 7, %s259
        %p261 = scmp.lt.s32.totalorder %s260, 2
        %s262 = scalar_select %p261, %s260, 2
        %s263 = smul.u32 128, %s262
        %p264 = scmp.lt.s32.totalorder %s259, 6
        %s265 = scalar_select %p264, %s259, 6
        %s266 = smul.addr %s265, 8
        %s267 = scalar_lea.vmem %s2, %s266
        %p268 = pneg %p91
        %p269 = pneg %p88
        %s270 = smul.u32 2, %s18
        %s271 = ssub.s32 7, %s270
        %p272 = scmp.lt.s32.totalorder %s271, 2
        %s273 = scalar_select %p272, %s271, 2
        %s274 = smul.u32 128, %s273
        %p275 = scmp.lt.s32.totalorder %s270, 6
        %s276 = scalar_select %p275, %s270, 6
        %s277 = smul.addr %s276, 8
        %s278 = scalar_lea.vmem %s3, %s277
        %p279 = pneg %p117
        %p280 = pneg %p114
        %p281 = pneg %p143
        %p282 = pneg %p140
        %s283 = sand.u32 %s130, 1
        %s284 = scalar_lea.sflag [#allocation3], %s283
        %s285 = sand.u32 %s130, 1
        %s286 = smul.addr %s285, 8
        %s287 = scalar_lea.vmem [#allocation2], %s286
        %s288 = smul.u32 2, %s18
        %s289 = ssub.s32 7, %s288
        %p290 = scmp.lt.s32.totalorder %s289, 2
        %s291 = scalar_select %p290, %s289, 2
        %s292 = smul.u32 128, %s291
        %p293 = scmp.lt.s32.totalorder %s288, 6
        %s294 = scalar_select %p293, %s288, 6
        %s295 = smul.addr %s294, 8
        %s296 = scalar_lea.vmem %s0, %s295
        %s297 = smul.u32 2, %s18
        %s298 = ssub.s32 7, %s297
        %p299 = scmp.lt.s32.totalorder %s298, 2
        %s300 = scalar_select %p299, %s298, 2
        %s301 = smul.u32 128, %s300
        %s302 = smul.u32 2, %s18
        %s303 = ssub.s32 7, %s302
        %p304 = scmp.lt.s32.totalorder %s303, 2
        %s305 = scalar_select %p304, %s303, 2
        %s306 = smul.u32 128, %s305
        %p307 = scmp.lt.s32.totalorder %s302, 6
        %s308 = scalar_select %p307, %s302, 6
        %s309 = smul.addr %s308, 8
        %s310 = scalar_lea.vmem %s1, %s309
        %s311 = smul.u32 2, %s18
        %s312 = ssub.s32 7, %s311
        %p313 = scmp.lt.s32.totalorder %s312, 2
        %s314 = scalar_select %p313, %s312, 2
        %s315 = smul.u32 128, %s314
        %s316 = smul.u32 2, %s18
        %s317 = ssub.s32 7, %s316
        %p318 = scmp.lt.s32.totalorder %s317, 2
        %s319 = scalar_select %p318, %s317, 2
        %s320 = smul.u32 128, %s319
        %p321 = scmp.lt.s32.totalorder %s316, 6
        %s322 = scalar_select %p321, %s316, 6
        %s323 = smul.addr %s322, 8
        %s324 = scalar_lea.vmem %s2, %s323
        %s325 = smul.u32 2, %s18
        %s326 = ssub.s32 7, %s325
        %p327 = scmp.lt.s32.totalorder %s326, 2
        %s328 = scalar_select %p327, %s326, 2
        %s329 = smul.u32 128, %s328
        %s330 = smul.u32 2, %s18
        %s331 = ssub.s32 7, %s330
        %p332 = scmp.lt.s32.totalorder %s331, 2
        %s333 = scalar_select %p332, %s331, 2
        %s334 = smul.u32 128, %s333
        %p335 = scmp.lt.s32.totalorder %s330, 6
        %s336 = scalar_select %p335, %s330, 6
        %s337 = smul.addr %s336, 8
        %s338 = scalar_lea.vmem %s3, %s337
        %s339 = smul.u32 2, %s18
        %s340 = ssub.s32 7, %s339
        %p341 = scmp.lt.s32.totalorder %s340, 2
        %s342 = scalar_select %p341, %s340, 2
        %s343 = smul.u32 128, %s342
        %v344 = vld [vmem:[%s296] sm:$0xff]
        %v345 = vld [vmem:[%s296 + $0x8] sm:$0xff]
        %v346 = vld [vmem:[%s310] sm:$0xff]
        %v347 = vld [vmem:[%s310 + $0x8] sm:$0xff]
        %v348 = vld [vmem:[%s324] sm:$0xff]
        %v349 = vld [vmem:[%s324 + $0x8] sm:$0xff]
        %v350 = vld [vmem:[%s338] sm:$0xff]
        %v351 = vld [vmem:[%s338 + $0x8] sm:$0xff]
        %v352 = vmul.f32 %v344, %v346
        %v353 = vmul.f32 %v345, %v347
        %vm354 = vcmask 261120
        %v355 = vsel %vm354, %v352, 0.0
        %356 = vadd.xlane.f32.xlu0 %v355
        %v357 = vpop.xlane.xlu0 %356
        %v358 = vsel %vm354, %v353, 0.0
        %359 = vadd.xlane.f32.xlu0 %v358
        %v360 = vpop.xlane.xlu0 %359
        %v361 = vmul.f32 %v348, %v350
        %v362 = vmul.f32 %v349, %v351
        %v363 = vsel %vm354, %v361, 0.0
        %364 = vadd.xlane.f32.xlu0 %v363
        %v365 = vpop.xlane.xlu0 %364
        %v366 = vsel %vm354, %v362, 0.0
        %367 = vadd.xlane.f32.xlu0 %v366
        %v368 = vpop.xlane.xlu0 %367
        %v369 = vmin.f32 %v357, 0.0
        %v370 = vmin.f32 %v360, 0.0
        %v371 = vand.u32 2147483647, %v357
        %v372 = vand.u32 2147483647, %v360
        %v373 = vsub.f32 0.0, %v371
        %v374 = vsub.f32 0.0, %v372
        %v375 = vmul.f32 %v373, 1.442695
        %v376 = vpow.pop %v375
        %v377 = vmul.f32 %v374, 1.442695
        %v378 = vpow.pop %v377
        %v379 = vadd.f32 %v376, 1.0
        %v380 = vlog2.pop %v379
        %v381 = vmul.f32 %v380, 0.6931472
        %v382 = vmul.f32 -0.5, %v376
        %v383 = vadd.f32 %v382, 1.0
        %v384 = vmul.f32 %v383, %v376
        %v385 = vand.u32 2147483647, %v376
        %vm386 = vcmp.lt.f32.partialorder %v385, 0.0004427343
        %v387 = vsel %vm386, %v384, %v381
        %v388 = vadd.f32 %v378, 1.0
        %v389 = vlog2.pop %v388
        %v390 = vmul.f32 %v389, 0.6931472
        %v391 = vmul.f32 -0.5, %v378
        %v392 = vadd.f32 %v391, 1.0
        %v393 = vmul.f32 %v392, %v378
        %v394 = vand.u32 2147483647, %v378
        %vm395 = vcmp.lt.f32.partialorder %v394, 0.0004427343
        %v396 = vsel %vm395, %v393, %v390
        %v397 = vsub.f32 %v369, %v387
        %v398 = vsub.f32 %v370, %v396
        %v399 = vsub.f32 0.0, %v365
        %v400 = vsub.f32 0.0, %v368
        %v401 = vmin.f32 %v399, 0.0
        %v402 = vmin.f32 %v400, 0.0
        %v403 = vand.u32 2147483647, %v399
        %v404 = vand.u32 2147483647, %v400
        %v405 = vsub.f32 0.0, %v403
        %v406 = vsub.f32 0.0, %v404
        %v407 = vmul.f32 %v405, 1.442695
        %v408 = vpow.pop %v407
        %v409 = vmul.f32 %v406, 1.442695
        %v410 = vpow.pop %v409
        %v411 = vadd.f32 %v408, 1.0
        %v412 = vlog2.pop %v411
        %v413 = vmul.f32 %v412, 0.6931472
        %v414 = vmul.f32 -0.5, %v408
        %v415 = vadd.f32 %v414, 1.0
        %v416 = vmul.f32 %v415, %v408
        %v417 = vand.u32 2147483647, %v408
        %vm418 = vcmp.lt.f32.partialorder %v417, 0.0004427343
        %v419 = vsel %vm418, %v416, %v413
        %v420 = vadd.f32 %v410, 1.0
        %v421 = vlog2.pop %v420
        %v422 = vmul.f32 %v421, 0.6931472
        %v423 = vmul.f32 -0.5, %v410
        %v424 = vadd.f32 %v423, 1.0
        %v425 = vmul.f32 %v424, %v410
        %v426 = vand.u32 2147483647, %v410
        %vm427 = vcmp.lt.f32.partialorder %v426, 0.0004427343
        %v428 = vsel %vm427, %v425, %v422
        %v429 = vsub.f32 %v401, %v419
        %v430 = vsub.f32 %v402, %v428
        %v431 = vadd.f32 %v397, %v429
        %v432 = vadd.f32 %v398, %v430
        %s433 = smul.u32 %s18, 16
        %v434 = vlaneseq
        %v435 = vshrl.u32 %v434, 7
        %v436 = vadd.s32 %v435, 8
        %v437 = vstv %s433
        %v438 = vadd.s32 %v437, %v435
        %v439 = vadd.s32 %v437, %v436
        %vm440 = vcmp.lt.s32.totalorder %v438, 50
        %vm441 = vcmp.lt.s32.totalorder %v439, 50
        %v442 = vsel %vm440, %v431, 0.0
        %v443 = vsel %vm441, %v432, 0.0
        %vm444 = vcmask 7168
        %v445 = vsel %vm444, %v442, 0.0
        %v446 = vsel %vm444, %v443, 0.0
        %v447 = vadd.f32 %v445, %v446
        %448 = vadd.xlane.f32.xlu0 %v447
        %v449 = vpop.xlane.xlu0 %448
        %v450 = vrot.slane %v449, 4
        %v451 = vadd.f32 %v449, %v450
        %v452 = vrot.slane %v451, 2
        %v453 = vadd.f32 %v451, %v452
        %v454 = vrot.slane %v453, 1
        %v455 = vadd.f32 %v453, %v454
        %s456 = vtos %v455
        %v457 = vstv %s456
        %v458 = vsub.f32 0.0, %v457
        %459 = vst [vmem:[%s287] sm:$0xff] %v458
        %s460 = sand.u32 %s130, 1
        %s461 = scalar_lea.sflag [#allocation3], %s460
        %s462 = sand.u32 %s130, 1
        %s463 = smul.addr %s462, 8
        %s464 = scalar_lea.vmem [#allocation2], %s463
        // Predicated region
        $region37: #{tpu_custom_call.1} parent=35 // pred_check
          %p465 = pneg %p140
        $region38: #{tpu_custom_call.1} parent=35 // pred_check_branch
          %467 = sbr.rel (%p465) target = $region40
        $region39: #{tpu_custom_call.1} parent=35 // pred_region
          %s469 = ssub.s32 128, 128
          %470 = vsyncadd %s461, %s469
          %s471 = smul.addr %s18, 128
          %s472 = scalar_lea.hbm %s4, %s471
          %s474 = sshll.u32 %s464, 4
          %s475 = int_to_ptr.vmem [resolvable:$true] %s474
          %477 = dma.vmem_to_hbm [thread:$0]  %s475, 128, %s472, %s461
        $region40: #{tpu_custom_call.1} parent=35 // pred_fallthru
          _
      $region36: #{tpu_custom_call.1} parent=5 // pred_fallthru
        _
      %p478 = scmp.le.s32.totalorder 2, %s13
      // Predicated region
      $region41: #{tpu_custom_call.1} parent=5 // pred_check
        %p479 = pneg %p478
      $region42: #{tpu_custom_call.1} parent=5 // pred_check_branch
        %481 = sbr.rel (%p479) target = $region44
      $region43: #{tpu_custom_call.1} parent=5 // pred_region
        %s482 = ssub.s32 %s13, 2
        // Predicated region
        $region45: #{tpu_custom_call.1} parent=43 // pred_check
          %p483 = pneg %p146
        $region46: #{tpu_custom_call.1} parent=43 // pred_check_branch
          %485 = sbr.rel (%p483) target = $region48
        $region47: #{tpu_custom_call.1} parent=43 // pred_region
          %s486 = sand.u32 %s131, 1
          %s487 = scalar_lea.sflag [#allocation3], %s486
          %s488 = sand.u32 %s131, 1
          %s489 = smul.addr %s488, 8
          %s490 = scalar_lea.vmem [#allocation2], %s489
          %491 = dma.done %s487, 128
        $region48: #{tpu_custom_call.1} parent=43 // pred_fallthru
          _
      $region44: #{tpu_custom_call.1} parent=5 // pred_fallthru
        _
    $region6: #{tpu_custom_call.1} parent=1 // loop_footer
      %s17 = sadd.s32 1, %s13
    $region7: #{tpu_custom_call.1} parent=1 // loop_footer_branch
      %12 = sbr.rel target = $region3
    $region8: #{tpu_custom_call.1} parent=1 // loop_exit
      _
    %492 = vsyncpa [#allocation3], 1
    %s493 = scalar_lea.sflag [#allocation3], 1
    %494 = vsyncpa %s493, 1

</llo_original>
